<compile_context>
chip_gen: v6e
topology: v6e:2x2x1
jax: 0.10.0
libtpu: 0.0.40
codegen_flags: <defaults>
</compile_context>

<pallas_src>
import jax
import jax.numpy as jnp
import numpy as np
from jax import lax
from jax.experimental import pallas as pl
from jax.experimental.pallas import tpu as pltpu

IN_FEATURES = 2
HIDDEN = 32
OUT_FEATURES = 1
W0 = 30.0

CHUNK_M = 256      # columns per inner-loop iteration (keeps live state ~spill-free)
MAX_TILE_M = 4096  # columns (rows of the original problem) per grid step


def _round_up(x, m):
    return ((x + m - 1) // m) * m


# ----------------------------------------------------------------------------
# Bounded-range sine: k = round(x/pi); r = x - k*pi (Cody-Waite 3-term split);
# odd degree-11 polynomial on [-pi/2, pi/2]; sign flip on odd k.
# Valid for |x| up to ~2^16 * pi; here |x| <= ~175.  Abs error ~4e-7.
# ----------------------------------------------------------------------------
_INV_PI = 0.3183098861837907
_PI_A = 3.140625                   # 201/64       (exact; k*_PI_A exact for |k| < 2^16)
_PI_B = 9.67502593994140625e-4     # 2029/2^21    (exact, 11 significant bits)
_PI_C = 1.5099579909783765e-7      # pi - _PI_A - _PI_B
_S3 = -1.0 / 6.0
_S5 = 1.0 / 120.0
_S7 = -1.0 / 5040.0
_S9 = 1.0 / 362880.0
_S11 = -1.0 / 39916800.0


def _sin_bounded(x):
    k = jnp.floor(x * _INV_PI + 0.5)          # round-to-nearest (ties don't matter)
    r = x - k * _PI_A
    r = r - k * _PI_B
    r = r - k * _PI_C                         # r in [-pi/2, pi/2]
    r2 = r * r
    p = _S11
    p = p * r2 + _S9
    p = p * r2 + _S7
    p = p * r2 + _S5
    p = p * r2 + _S3
    s = r + r * (r2 * p)
    # parity of k via float ops only (avoids int casts): frac(k/2) is 0.0 or 0.5
    half = k * 0.5
    k_is_odd = (half - jnp.floor(half)) > 0.25
    return jnp.where(k_is_odd, -s, s)


# ----------------------------------------------------------------------------
# Kernel: feature-major.  xt_ref (IN, TILE_M) -> o_ref (1, TILE_M), processed
# in CHUNK_M-column chunks by an unrolled fori_loop.
# ----------------------------------------------------------------------------
def _inr_kernel(xt_ref, w1_ref, b1_ref, w2_ref, b2_ref, w3_ref, b3_ref, o_ref):
    w1 = w1_ref[...]
    b1 = b1_ref[...]
    w2 = w2_ref[...]
    b2 = b2_ref[...]
    w3 = w3_ref[...]
    b3 = b3_ref[...]                     # already contains the final "+ 0.5"

    num_chunks = o_ref.shape[-1] // CHUNK_M

    def chunk_body(c, carry):
        col = pl.multiple_of(c * CHUNK_M, CHUNK_M)
        xt = xt_ref[:, pl.ds(col, CHUNK_M)]                        # (IN, CHUNK)
        # layer 1: sin(30 * (W1 x + b1))
        h = jnp.dot(w1, xt, preferred_element_type=jnp.float32) + b1
        h = _sin_bounded(W0 * h)                                   # (HIDDEN, CHUNK)
        # layer 2: sin(30 * (W2 h + b2))
        h = jnp.dot(w2, h, preferred_element_type=jnp.float32) + b2
        h = _sin_bounded(W0 * h)                                   # (HIDDEN, CHUNK)
        # output layer (+0.5 folded into b3): lane-dense (1, CHUNK) store
        out = jnp.dot(w3, h, preferred_element_type=jnp.float32) + b3
        o_ref[:, pl.ds(col, CHUNK_M)] = out.astype(o_ref.dtype)
        return carry

    lax.fori_loop(0, num_chunks, chunk_body, 0, unroll=True)


# ----------------------------------------------------------------------------
# Parameter prep (one-time, outside the hot loop)
# ----------------------------------------------------------------------------
def prepare_params(params):
    """Transpose weights to (out, in), biases to columns, fold +0.5 into b3.
    W0 is NOT folded (keeps the sin arguments bit-faithful to the module)."""
    w1, b1, w2, b2, w3, b3 = params
    return (
        w1.T,                                    # (HIDDEN, IN_FEATURES)
        b1.reshape(HIDDEN, 1),                   # (HIDDEN, 1)
        w2.T,                                    # (HIDDEN, HIDDEN)
        b2.reshape(HIDDEN, 1),                   # (HIDDEN, 1)
        w3.T,                                    # (OUT_FEATURES, HIDDEN)
        b3.reshape(OUT_FEATURES, 1) + 0.5,       # (OUT_FEATURES, 1), +0.5 folded
    )


# ----------------------------------------------------------------------------
# Tiling policy: pad only to a multiple of CHUNK_M, tile = divisor of padded
# size, grid >= 2 when there are >= 2 chunks (v7x 2-TC split).
# ----------------------------------------------------------------------------
def _choose_tiling(rows):
    padded_rows = _round_up(max(rows, 1), CHUNK_M)
    n_chunks = padded_rows // CHUNK_M
    max_cpt = MAX_TILE_M // CHUNK_M
    if n_chunks >= 2:
        limit = min(max_cpt, max(1, n_chunks // 2))
    else:
        limit = 1
    cpt = max(d for d in range(1, limit + 1) if n_chunks % d == 0)
    return padded_rows, cpt * CHUNK_M, n_chunks // cpt


def inr_forward_fm(xt, prepared_params):
    """Feature-major forward.  xt: (IN_FEATURES, N) float32 -> (1, N) float32."""
    w1t, b1t, w2t, b2t, w3t, b3t = prepared_params
    in_f, rows = xt.shape
    assert in_f == IN_FEATURES
    padded_rows, tile_m, grid_m = _choose_tiling(rows)
    if padded_rows != rows:
        xt = jnp.pad(xt, ((0, 0), (0, padded_rows - rows)))

    full = lambda shape: pl.BlockSpec(shape, lambda i: (0, 0))

    weight_bytes = 4 * (HIDDEN * IN_FEATURES + HIDDEN + HIDDEN * HIDDEN + HIDDEN
                        + OUT_FEATURES * HIDDEN + OUT_FEATURES)
    cost = pl.CostEstimate(
        flops=2 * padded_rows * (IN_FEATURES * HIDDEN + HIDDEN * HIDDEN
                                 + HIDDEN * OUT_FEATURES),
        transcendentals=2 * HIDDEN * padded_rows,
        bytes_accessed=4 * (IN_FEATURES + OUT_FEATURES) * padded_rows + weight_bytes,
    )

    out = pl.pallas_call(
        _inr_kernel,
        out_shape=jax.ShapeDtypeStruct((OUT_FEATURES, padded_rows), jnp.float32),
        grid_spec=pltpu.PrefetchScalarGridSpec(
            num_scalar_prefetch=0,
            grid=(grid_m,),
            in_specs=[
                pl.BlockSpec((IN_FEATURES, tile_m), lambda i: (0, i)),
                full((HIDDEN, IN_FEATURES)),
                full((HIDDEN, 1)),
                full((HIDDEN, HIDDEN)),
                full((HIDDEN, 1)),
                full((OUT_FEATURES, HIDDEN)),
                full((OUT_FEATURES, 1)),
            ],
            out_specs=pl.BlockSpec((OUT_FEATURES, tile_m), lambda i: (0, i)),
        ),
        compiler_params=pltpu.CompilerParams(dimension_semantics=("parallel",)),
        cost_estimate=cost,
    )(xt, w1t, b1t, w2t, b2t, w3t, b3t)

    return out[:, :rows]


def inr_forward(x, prepared_params):
    """Module-layout forward: x (bs, n_points, 2) -> (bs, n_points, 1)."""
    bs, n_points, in_f = x.shape
    rows = bs * n_points
    xt = x.reshape(rows, in_f).T     # small layout op; prefer inr_forward_fm upstream
    out = inr_forward_fm(xt, prepared_params)
    return out[0].reshape(bs, n_points, OUT_FEATURES)


# ----------------------------------------------------------------------------
# Reference, init, demo
# ----------------------------------------------------------------------------
def init_params(key):
    """nn.Linear-default-style init: uniform(-1/sqrt(fan_in), 1/sqrt(fan_in)).
    Stored as (in, out) weights / (1, out) biases (the module's math layout)."""
    def linear(key, fan_in, fan_out):
        kw, kb = jax.random.split(key)
        bound = 1.0 / np.sqrt(fan_in)
        w = jax.random.uniform(kw, (fan_in, fan_out), jnp.float32, -bound, bound)
        b = jax.random.uniform(kb, (1, fan_out), jnp.float32, -bound, bound)
        return w, b

    k1, k2, k3 = jax.random.split(key, 3)
    w1, b1 = linear(k1, IN_FEATURES, HIDDEN)
    w2, b2 = linear(k2, HIDDEN, HIDDEN)
    w3, b3 = linear(k3, HIDDEN, OUT_FEATURES)
    return (w1, b1, w2, b2, w3, b3)


def inr_reference(x, params):
    """Pure-JAX reference mirroring the PyTorch forward (f32-accurate matmuls)."""
    w1, b1, w2, b2, w3, b3 = params
    hi = jax.lax.Precision.HIGHEST
    h = jnp.sin(W0 * (jnp.dot(x, w1, precision=hi) + b1))
    h = jnp.sin(W0 * (jnp.dot(h, w2, precision=hi) + b2))
    return jnp.dot(h, w3, precision=hi) + b3 + 0.5


if __name__ == "__main__":
    key = jax.random.PRNGKey(0)
    params = init_params(key)
    prepared = prepare_params(params)    # one-time: transpose, column biases, +0.5 fold

    # Small shapes: batch=2, 16x16 coordinate grid -> 512 points of dim 2.
    bs, grid_shape = 2, (16, 16)
    npts = grid_shape[0] * grid_shape[1]
    xs = np.linspace(-1.0, 1.0, grid_shape[0])
    ys = np.linspace(-1.0, 1.0, grid_shape[1])
    xg, yg = np.meshgrid(xs, ys)
    coords_single = np.stack([xg.flatten(), yg.flatten()]).astype(np.float32)   # (2, npts)

    x_fm = jnp.asarray(np.tile(coords_single, (1, bs)))                # (2, bs*npts) feature-major
    x_std = jnp.asarray(np.repeat(coords_single.T[None], bs, axis=0))  # (bs, npts, 2) module layout

    # Optimized feature-major path (no device-side pad/transpose).
    y_fm = jax.block_until_ready(inr_forward_fm(x_fm, prepared))       # (1, bs*npts)
    # Module-layout convenience wrapper.
    y = jax.block_until_ready(inr_forward(x_std, prepared))            # (bs, npts, 1)

    y_ref = inr_reference(x_std, params)

    # Tolerance note: sin arguments reach |arg| ~ 175, so f32 rounding in the
    # matmuls and the ~4e-7 bounded-range sine error get amplified through two
    # sine layers; 2e-4 gives ~10x margin over the expected worst case while
    # still catching any structural bug (outputs are O(0.5)).
    np.testing.assert_allclose(np.asarray(y), np.asarray(y_ref), rtol=2e-4, atol=2e-4)
    np.testing.assert_allclose(np.asarray(y_fm[0]).reshape(bs, npts, 1),
                               np.asarray(y), rtol=1e-6, atol=1e-6)

    print("KERNEL_OK")
</pallas_src>

<mosaic_0001>
module attributes {stable_mosaic.version = 11 : i64} {
  func.func @_inr_kernel(%arg0: i32, %arg1: memref<2x256xf32, #tpu.memory_space<vmem>>, %arg2: memref<32x2xf32, #tpu.memory_space<vmem>>, %arg3: memref<32x1xf32, #tpu.memory_space<vmem>>, %arg4: memref<32x32xf32, #tpu.memory_space<vmem>>, %arg5: memref<32x1xf32, #tpu.memory_space<vmem>>, %arg6: memref<1x32xf32, #tpu.memory_space<vmem>>, %arg7: memref<1x1xf32, #tpu.memory_space<vmem>>, %arg8: memref<1x256xf32, #tpu.memory_space<vmem>>) attributes {dimension_semantics = [#tpu.dimension_semantics<parallel>], iteration_bounds = array<i64: 2>, scalar_prefetch = 0 : i64, scratch_operands = 0 : i64, tpu.core_type = #tpu.core_type<tc>, window_params = [{transform_indices = @transform_0, window_bounds = array<i64: 2, 256>}, {pipeline_mode = #tpu.pipeline_mode<synchronous>, transform_indices = @transform_1, window_bounds = array<i64: 32, 2>}, {pipeline_mode = #tpu.pipeline_mode<synchronous>, transform_indices = @transform_2, window_bounds = array<i64: 32, 1>}, {pipeline_mode = #tpu.pipeline_mode<synchronous>, transform_indices = @transform_3, window_bounds = array<i64: 32, 32>}, {pipeline_mode = #tpu.pipeline_mode<synchronous>, transform_indices = @transform_4, window_bounds = array<i64: 32, 1>}, {pipeline_mode = #tpu.pipeline_mode<synchronous>, transform_indices = @transform_5, window_bounds = array<i64: 1, 32>}, {pipeline_mode = #tpu.pipeline_mode<synchronous>, transform_indices = @transform_6, window_bounds = array<i64: 1, 1>}, {transform_indices = @transform_7, window_bounds = array<i64: 1, 256>}]} {
    %c0 = arith.constant 0 : index
    %c0_0 = arith.constant 0 : index
    %0 = vector.load %arg2[%c0, %c0_0] : memref<32x2xf32, #tpu.memory_space<vmem>>, vector<32x2xf32>
    %c0_1 = arith.constant 0 : index
    %c0_2 = arith.constant 0 : index
    %1 = vector.load %arg3[%c0_1, %c0_2] : memref<32x1xf32, #tpu.memory_space<vmem>>, vector<32x1xf32>
    %c0_3 = arith.constant 0 : index
    %c0_4 = arith.constant 0 : index
    %2 = vector.load %arg4[%c0_3, %c0_4] : memref<32x32xf32, #tpu.memory_space<vmem>>, vector<32x32xf32>
    %c0_5 = arith.constant 0 : index
    %c0_6 = arith.constant 0 : index
    %3 = vector.load %arg5[%c0_5, %c0_6] : memref<32x1xf32, #tpu.memory_space<vmem>>, vector<32x1xf32>
    %c0_7 = arith.constant 0 : index
    %c0_8 = arith.constant 0 : index
    %4 = vector.load %arg6[%c0_7, %c0_8] : memref<1x32xf32, #tpu.memory_space<vmem>>, vector<1x32xf32>
    %c0_9 = arith.constant 0 : index
    %c0_10 = arith.constant 0 : index
    %5 = vector.load %arg7[%c0_9, %c0_10] : memref<1x1xf32, #tpu.memory_space<vmem>>, vector<1x1xf32>
    %c0_i32 = arith.constant 0 : i32
    %c256_i32 = arith.constant 256 : i32
    %6 = arith.muli %c0_i32, %c256_i32 : i32
    %7 = tpu.assume_multiple %6, 256 : i32
    %c0_11 = arith.constant 0 : index
    %8 = arith.index_cast %7 : i32 to index
    %9 = vector.load %arg1[%c0_11, %8] : memref<2x256xf32, #tpu.memory_space<vmem>>, vector<2x256xf32>
    %cst = arith.constant dense<0.000000e+00> : vector<32x256xf32>
    %10 = tpu.matmul %0, %9, %cst {dimension_numbers = #tpu.dot_dimension_numbers<[1], [0], [0], [1], [0, 0, 1, 1], [], []>} : vector<32x2xf32>, vector<2x256xf32>, vector<32x256xf32> -> vector<32x256xf32>
    %11 = vector.broadcast %1 : vector<32x1xf32> to vector<32x256xf32>
    %12 = arith.addf %10, %11 : vector<32x256xf32>
    %cst_12 = arith.constant 3.000000e+01 : f32
    %13 = vector.broadcast %cst_12 : f32 to vector<32x256xf32>
    %14 = arith.mulf %13, %12 : vector<32x256xf32>
    %cst_13 = arith.constant 0.318309873 : f32
    %15 = vector.broadcast %cst_13 : f32 to vector<32x256xf32>
    %16 = arith.mulf %14, %15 : vector<32x256xf32>
    %cst_14 = arith.constant 5.000000e-01 : f32
    %17 = vector.broadcast %cst_14 : f32 to vector<32x256xf32>
    %18 = arith.addf %16, %17 : vector<32x256xf32>
    %19 = math.floor %18 : vector<32x256xf32>
    %cst_15 = arith.constant 3.140625 : f32
    %20 = vector.broadcast %cst_15 : f32 to vector<32x256xf32>
    %21 = arith.mulf %19, %20 : vector<32x256xf32>
    %22 = arith.subf %14, %21 : vector<32x256xf32>
    %cst_16 = arith.constant 9.67502593E-4 : f32
    %23 = vector.broadcast %cst_16 : f32 to vector<32x256xf32>
    %24 = arith.mulf %19, %23 : vector<32x256xf32>
    %25 = arith.subf %22, %24 : vector<32x256xf32>
    %cst_17 = arith.constant 1.50995803E-7 : f32
    %26 = vector.broadcast %cst_17 : f32 to vector<32x256xf32>
    %27 = arith.mulf %19, %26 : vector<32x256xf32>
    %28 = arith.subf %25, %27 : vector<32x256xf32>
    %29 = arith.mulf %28, %28 : vector<32x256xf32>
    %cst_18 = arith.constant -2.50521079E-8 : f32
    %30 = vector.broadcast %cst_18 : f32 to vector<32x256xf32>
    %31 = arith.mulf %30, %29 : vector<32x256xf32>
    %cst_19 = arith.constant 2.75573188E-6 : f32
    %32 = vector.broadcast %cst_19 : f32 to vector<32x256xf32>
    %33 = arith.addf %31, %32 : vector<32x256xf32>
    %34 = arith.mulf %33, %29 : vector<32x256xf32>
    %cst_20 = arith.constant -1.98412701E-4 : f32
    %35 = vector.broadcast %cst_20 : f32 to vector<32x256xf32>
    %36 = arith.addf %34, %35 : vector<32x256xf32>
    %37 = arith.mulf %36, %29 : vector<32x256xf32>
    %cst_21 = arith.constant 0.00833333377 : f32
    %38 = vector.broadcast %cst_21 : f32 to vector<32x256xf32>
    %39 = arith.addf %37, %38 : vector<32x256xf32>
    %40 = arith.mulf %39, %29 : vector<32x256xf32>
    %cst_22 = arith.constant -0.166666672 : f32
    %41 = vector.broadcast %cst_22 : f32 to vector<32x256xf32>
    %42 = arith.addf %40, %41 : vector<32x256xf32>
    %43 = arith.mulf %29, %42 : vector<32x256xf32>
    %44 = arith.mulf %28, %43 : vector<32x256xf32>
    %45 = arith.addf %28, %44 : vector<32x256xf32>
    %cst_23 = arith.constant 5.000000e-01 : f32
    %46 = vector.broadcast %cst_23 : f32 to vector<32x256xf32>
    %47 = arith.mulf %19, %46 : vector<32x256xf32>
    %48 = math.floor %47 : vector<32x256xf32>
    %49 = arith.subf %47, %48 : vector<32x256xf32>
    %cst_24 = arith.constant 2.500000e-01 : f32
    %50 = vector.broadcast %cst_24 : f32 to vector<32x256xf32>
    %51 = arith.cmpf ogt, %49, %50 : vector<32x256xf32>
    %cst_25 = arith.constant 0.000000e+00 : f32
    %52 = vector.broadcast %cst_25 : f32 to vector<32x256xf32>
    %53 = arith.subf %52, %45 : vector<32x256xf32>
    %54 = arith.select %51, %53, %45 : vector<32x256xi1>, vector<32x256xf32>
    %cst_26 = arith.constant dense<0.000000e+00> : vector<32x256xf32>
    %55 = tpu.matmul %2, %54, %cst_26 {dimension_numbers = #tpu.dot_dimension_numbers<[1], [0], [0], [1], [0, 0, 1, 1], [], []>} : vector<32x32xf32>, vector<32x256xf32>, vector<32x256xf32> -> vector<32x256xf32>
    %56 = vector.broadcast %3 : vector<32x1xf32> to vector<32x256xf32>
    %57 = arith.addf %55, %56 : vector<32x256xf32>
    %cst_27 = arith.constant 3.000000e+01 : f32
    %58 = vector.broadcast %cst_27 : f32 to vector<32x256xf32>
    %59 = arith.mulf %58, %57 : vector<32x256xf32>
    %cst_28 = arith.constant 0.318309873 : f32
    %60 = vector.broadcast %cst_28 : f32 to vector<32x256xf32>
    %61 = arith.mulf %59, %60 : vector<32x256xf32>
    %cst_29 = arith.constant 5.000000e-01 : f32
    %62 = vector.broadcast %cst_29 : f32 to vector<32x256xf32>
    %63 = arith.addf %61, %62 : vector<32x256xf32>
    %64 = math.floor %63 : vector<32x256xf32>
    %cst_30 = arith.constant 3.140625 : f32
    %65 = vector.broadcast %cst_30 : f32 to vector<32x256xf32>
    %66 = arith.mulf %64, %65 : vector<32x256xf32>
    %67 = arith.subf %59, %66 : vector<32x256xf32>
    %cst_31 = arith.constant 9.67502593E-4 : f32
    %68 = vector.broadcast %cst_31 : f32 to vector<32x256xf32>
    %69 = arith.mulf %64, %68 : vector<32x256xf32>
    %70 = arith.subf %67, %69 : vector<32x256xf32>
    %cst_32 = arith.constant 1.50995803E-7 : f32
    %71 = vector.broadcast %cst_32 : f32 to vector<32x256xf32>
    %72 = arith.mulf %64, %71 : vector<32x256xf32>
    %73 = arith.subf %70, %72 : vector<32x256xf32>
    %74 = arith.mulf %73, %73 : vector<32x256xf32>
    %cst_33 = arith.constant -2.50521079E-8 : f32
    %75 = vector.broadcast %cst_33 : f32 to vector<32x256xf32>
    %76 = arith.mulf %75, %74 : vector<32x256xf32>
    %cst_34 = arith.constant 2.75573188E-6 : f32
    %77 = vector.broadcast %cst_34 : f32 to vector<32x256xf32>
    %78 = arith.addf %76, %77 : vector<32x256xf32>
    %79 = arith.mulf %78, %74 : vector<32x256xf32>
    %cst_35 = arith.constant -1.98412701E-4 : f32
    %80 = vector.broadcast %cst_35 : f32 to vector<32x256xf32>
    %81 = arith.addf %79, %80 : vector<32x256xf32>
    %82 = arith.mulf %81, %74 : vector<32x256xf32>
    %cst_36 = arith.constant 0.00833333377 : f32
    %83 = vector.broadcast %cst_36 : f32 to vector<32x256xf32>
    %84 = arith.addf %82, %83 : vector<32x256xf32>
    %85 = arith.mulf %84, %74 : vector<32x256xf32>
    %cst_37 = arith.constant -0.166666672 : f32
    %86 = vector.broadcast %cst_37 : f32 to vector<32x256xf32>
    %87 = arith.addf %85, %86 : vector<32x256xf32>
    %88 = arith.mulf %74, %87 : vector<32x256xf32>
    %89 = arith.mulf %73, %88 : vector<32x256xf32>
    %90 = arith.addf %73, %89 : vector<32x256xf32>
    %cst_38 = arith.constant 5.000000e-01 : f32
    %91 = vector.broadcast %cst_38 : f32 to vector<32x256xf32>
    %92 = arith.mulf %64, %91 : vector<32x256xf32>
    %93 = math.floor %92 : vector<32x256xf32>
    %94 = arith.subf %92, %93 : vector<32x256xf32>
    %cst_39 = arith.constant 2.500000e-01 : f32
    %95 = vector.broadcast %cst_39 : f32 to vector<32x256xf32>
    %96 = arith.cmpf ogt, %94, %95 : vector<32x256xf32>
    %cst_40 = arith.constant 0.000000e+00 : f32
    %97 = vector.broadcast %cst_40 : f32 to vector<32x256xf32>
    %98 = arith.subf %97, %90 : vector<32x256xf32>
    %99 = arith.select %96, %98, %90 : vector<32x256xi1>, vector<32x256xf32>
    %cst_41 = arith.constant dense<0.000000e+00> : vector<1x256xf32>
    %100 = tpu.matmul %4, %99, %cst_41 {dimension_numbers = #tpu.dot_dimension_numbers<[1], [0], [0], [1], [0, 0, 1, 1], [], []>} : vector<1x32xf32>, vector<32x256xf32>, vector<1x256xf32> -> vector<1x256xf32>
    %101 = vector.broadcast %5 : vector<1x1xf32> to vector<1x256xf32>
    %102 = arith.addf %100, %101 : vector<1x256xf32>
    %c0_42 = arith.constant 0 : index
    %103 = arith.index_cast %7 : i32 to index
    %104 = vector.load %arg8[%c0_42, %103] : memref<1x256xf32, #tpu.memory_space<vmem>>, vector<1x256xf32>
    tpu.vector_store %arg8[%c0_42, %103], %102 {strides = array<i32>} : memref<1x256xf32, #tpu.memory_space<vmem>>, vector<1x256xf32>,
    %c1_i32 = arith.constant 1 : i32
    return
  }
  func.func @transform_0(%arg0: i32) -> (i32, i32) {
    %c0_i32 = arith.constant 0 : i32
    %c0_i32_0 = arith.constant 0 : i32
    return %c0_i32, %arg0 : i32, i32
  }
  func.func @transform_1(%arg0: i32) -> (i32, i32) {
    %c0_i32 = arith.constant 0 : i32
    %c0_i32_0 = arith.constant 0 : i32
    %c0_i32_1 = arith.constant 0 : i32
    return %c0_i32, %c0_i32_0 : i32, i32
  }
  func.func @transform_2(%arg0: i32) -> (i32, i32) {
    %c0_i32 = arith.constant 0 : i32
    %c0_i32_0 = arith.constant 0 : i32
    %c0_i32_1 = arith.constant 0 : i32
    return %c0_i32, %c0_i32_0 : i32, i32
  }
  func.func @transform_3(%arg0: i32) -> (i32, i32) {
    %c0_i32 = arith.constant 0 : i32
    %c0_i32_0 = arith.constant 0 : i32
    %c0_i32_1 = arith.constant 0 : i32
    return %c0_i32, %c0_i32_0 : i32, i32
  }
  func.func @transform_4(%arg0: i32) -> (i32, i32) {
    %c0_i32 = arith.constant 0 : i32
    %c0_i32_0 = arith.constant 0 : i32
    %c0_i32_1 = arith.constant 0 : i32
    return %c0_i32, %c0_i32_0 : i32, i32
  }
  func.func @transform_5(%arg0: i32) -> (i32, i32) {
    %c0_i32 = arith.constant 0 : i32
    %c0_i32_0 = arith.constant 0 : i32
    %c0_i32_1 = arith.constant 0 : i32
    return %c0_i32, %c0_i32_0 : i32, i32
  }
  func.func @transform_6(%arg0: i32) -> (i32, i32) {
    %c0_i32 = arith.constant 0 : i32
    %c0_i32_0 = arith.constant 0 : i32
    %c0_i32_1 = arith.constant 0 : i32
    return %c0_i32, %c0_i32_0 : i32, i32
  }
  func.func @transform_7(%arg0: i32) -> (i32, i32) {
    %c0_i32 = arith.constant 0 : i32
    %c0_i32_0 = arith.constant 0 : i32
    return %c0_i32, %arg0 : i32, i32
  }
}

</mosaic_0001>

<llo_original>
// kernel: tpu_custom_call.1
$region0: #{tpu_custom_call.1}
  #allocation0 [shape = 'u32[]', space=smem, size = 0x4, offset = 0x4, fixed_abs, tag = 'smem constant byte address 0x4 - core index']
  #allocation1 [shape = 'u32[144,128]{1,0:T(1,128)}', space=vmem, size = 0x12000, scoped, tag = 'internal scratch']
  #allocation2 [shape = 'f32[1,1]{1,0:T(1,128)S(1)}', space=vmem, size = 0x200, scoped, tag = 'scoped memory for tpu_custom_call.1']
  %s0 = inlined_call_operand.vmem [shape: f32[2,512], index: 0, kind: input, shape index: {}]
  %s1 = inlined_call_operand.vmem [shape: f32[32,2], index: 1, kind: input, shape index: {}]
  %s2 = inlined_call_operand.vmem [shape: f32[32,1], index: 2, kind: input, shape index: {}]
  %s3 = inlined_call_operand.vmem [shape: f32[32,32], index: 3, kind: input, shape index: {}]
  %s4 = inlined_call_operand.vmem [shape: f32[32,1], index: 4, kind: input, shape index: {}]
  %s5 = inlined_call_operand.vmem [shape: f32[1,32], index: 5, kind: input, shape index: {}]
  %s6 = inlined_call_operand.<no memory space> [shape: f32[1,1], index: 6, kind: input, shape index: {}]
  %s7 = inlined_call_operand.hbm [shape: f32[1,512], index: 7, kind: output, shape index: {}]
  %s8 = sld [smem:[#allocation0]]
  $region61: #{tpu_custom_call.1} parent=0
    _
  %s10 = ssub.s32 1, %s8
  %s11 = scalar_select 0, %s10, %s8
  %v12 = vstv %s6
  %13 = vst [vmem:[#allocation2] sm:$0x1] %v12
  $region1: #{tpu_custom_call.1} parent=0
    #allocation3 [shape = 'u8[2048]{0}', space=vmem, size = 0x800, scoped, tag = 'output window, operand 0']
    #allocation4 [shape = 's32[2]{0}', space=sflag, size = 0x8, scoped, tag = 'scoped memory for tpu_custom_call.1']
    %14 = vsyncpa [#allocation4], 0
    %s15 = scalar_lea.sflag [#allocation4], 1
    %16 = vsyncpa %s15, 0
    loop: start=0, step=1, limit=4
    $region2: #{tpu_custom_call.1} parent=1 // loop_pre_header
      _
    $region3: #{tpu_custom_call.1} parent=1 // loop_header
      %s18 = sphi 0, %s22
      %p19 = scmp.ge.s32.totalorder %s18, 4
      %s28 = sphi 0, %s30
      %s31 = sphi 0, %s28
      %s32 = sphi 0, %s31
      %s48 = sphi 0, %s32
      %s52 = sphi 0, %s52
      %s54 = sphi 0, %s52
      %s55 = sphi 0, %s54
      %s69 = sphi 0, %s55
      %s73 = sphi 0, %s73
      %s75 = sphi 0, %s73
      %s76 = sphi 0, %s75
      %s90 = sphi 0, %s76
      %s94 = sphi 0, %s94
      %s96 = sphi 0, %s94
      %s97 = sphi 0, %s96
      %s111 = sphi 0, %s97
      %s115 = sphi 0, %s115
      %s117 = sphi 0, %s115
      %s118 = sphi 0, %s117
      %s132 = sphi 0, %s118
      %s136 = sphi 0, %s136
      %s138 = sphi 0, %s136
      %s139 = sphi 0, %s138
      %s153 = sphi 0, %s139
      %s157 = sphi 0, %s157
      %s159 = sphi 0, %s157
      %s160 = sphi 0, %s159
      %s174 = sphi 0, %s160
      %s180 = sphi 0, %s182
      %s183 = sphi 0, %s180
      %s184 = sphi 0, %s183
      %s200 = sphi 0, %s184
    $region4: #{tpu_custom_call.1} parent=1 // loop_header_branch
      %21 = sbr.rel (%p19) target = $region8
    $region5: #{tpu_custom_call.1} parent=1 // loop_body
      %s23 = ssub.s32 %s18, 1
      %s24 = ssub.s32 %s18, 2
      %s25 = sadd.s32 %s18, 1
      %s26 = ssub.s32 %s18, %s25
      %p27 = scmp.eq.s32.totalorder %s26, 0
      %s29 = sadd.s32 %s28, 1
      %s30 = scalar_select %p27, %s28, %s29
      %p33 = pneg %p27
      %p34 = scmp.eq.s32.totalorder %s18, 1
      %p35 = por %p33, %p34
      %p36 = scmp.ne.s32.totalorder %s28, %s31
      %p37 = scmp.eq.s32.totalorder %s18, 0
      %p38 = por %p36, %p37
      %p39 = scmp.ne.s32.totalorder %s28, %s31
      %p40 = scmp.eq.s32.totalorder %s23, 1
      %p41 = por %p39, %p40
      %p42 = scmp.ne.s32.totalorder %s31, %s32
      %p43 = scmp.eq.s32.totalorder %s23, 0
      %p44 = por %p42, %p43
      %p45 = scmp.ne.s32.totalorder %s31, %s32
      %p46 = scmp.eq.s32.totalorder %s24, 1
      %p47 = por %p45, %p46
      %p49 = scmp.ne.s32.totalorder %s32, %s48
      %p50 = scmp.eq.s32.totalorder %s24, 0
      %p51 = por %p49, %p50
      %s53 = sadd.s32 %s52, 1
      %p56 = scmp.eq.s32.totalorder %s18, 1
      %p57 = scmp.ne.s32.totalorder %s52, %s54
      %p58 = scmp.eq.s32.totalorder %s18, 0
      %p59 = por %p57, %p58
      %p60 = scmp.ne.s32.totalorder %s52, %s54
      %p61 = scmp.eq.s32.totalorder %s23, 1
      %p62 = por %p60, %p61
      %p63 = scmp.ne.s32.totalorder %s54, %s55
      %p64 = scmp.eq.s32.totalorder %s23, 0
      %p65 = por %p63, %p64
      %p66 = scmp.ne.s32.totalorder %s54, %s55
      %p67 = scmp.eq.s32.totalorder %s24, 1
      %p68 = por %p66, %p67
      %p70 = scmp.ne.s32.totalorder %s55, %s69
      %p71 = scmp.eq.s32.totalorder %s24, 0
      %p72 = por %p70, %p71
      %s74 = sadd.s32 %s73, 1
      %p77 = scmp.eq.s32.totalorder %s18, 1
      %p78 = scmp.ne.s32.totalorder %s73, %s75
      %p79 = scmp.eq.s32.totalorder %s18, 0
      %p80 = por %p78, %p79
      %p81 = scmp.ne.s32.totalorder %s73, %s75
      %p82 = scmp.eq.s32.totalorder %s23, 1
      %p83 = por %p81, %p82
      %p84 = scmp.ne.s32.totalorder %s75, %s76
      %p85 = scmp.eq.s32.totalorder %s23, 0
      %p86 = por %p84, %p85
      %p87 = scmp.ne.s32.totalorder %s75, %s76
      %p88 = scmp.eq.s32.totalorder %s24, 1
      %p89 = por %p87, %p88
      %p91 = scmp.ne.s32.totalorder %s76, %s90
      %p92 = scmp.eq.s32.totalorder %s24, 0
      %p93 = por %p91, %p92
      %s95 = sadd.s32 %s94, 1
      %p98 = scmp.eq.s32.totalorder %s18, 1
      %p99 = scmp.ne.s32.totalorder %s94, %s96
      %p100 = scmp.eq.s32.totalorder %s18, 0
      %p101 = por %p99, %p100
      %p102 = scmp.ne.s32.totalorder %s94, %s96
      %p103 = scmp.eq.s32.totalorder %s23, 1
      %p104 = por %p102, %p103
      %p105 = scmp.ne.s32.totalorder %s96, %s97
      %p106 = scmp.eq.s32.totalorder %s23, 0
      %p107 = por %p105, %p106
      %p108 = scmp.ne.s32.totalorder %s96, %s97
      %p109 = scmp.eq.s32.totalorder %s24, 1
      %p110 = por %p108, %p109
      %p112 = scmp.ne.s32.totalorder %s97, %s111
      %p113 = scmp.eq.s32.totalorder %s24, 0
      %p114 = por %p112, %p113
      %s116 = sadd.s32 %s115, 1
      %p119 = scmp.eq.s32.totalorder %s18, 1
      %p120 = scmp.ne.s32.totalorder %s115, %s117
      %p121 = scmp.eq.s32.totalorder %s18, 0
      %p122 = por %p120, %p121
      %p123 = scmp.ne.s32.totalorder %s115, %s117
      %p124 = scmp.eq.s32.totalorder %s23, 1
      %p125 = por %p123, %p124
      %p126 = scmp.ne.s32.totalorder %s117, %s118
      %p127 = scmp.eq.s32.totalorder %s23, 0
      %p128 = por %p126, %p127
      %p129 = scmp.ne.s32.totalorder %s117, %s118
      %p130 = scmp.eq.s32.totalorder %s24, 1
      %p131 = por %p129, %p130
      %p133 = scmp.ne.s32.totalorder %s118, %s132
      %p134 = scmp.eq.s32.totalorder %s24, 0
      %p135 = por %p133, %p134
      %s137 = sadd.s32 %s136, 1
      %p140 = scmp.eq.s32.totalorder %s18, 1
      %p141 = scmp.ne.s32.totalorder %s136, %s138
      %p142 = scmp.eq.s32.totalorder %s18, 0
      %p143 = por %p141, %p142
      %p144 = scmp.ne.s32.totalorder %s136, %s138
      %p145 = scmp.eq.s32.totalorder %s23, 1
      %p146 = por %p144, %p145
      %p147 = scmp.ne.s32.totalorder %s138, %s139
      %p148 = scmp.eq.s32.totalorder %s23, 0
      %p149 = por %p147, %p148
      %p150 = scmp.ne.s32.totalorder %s138, %s139
      %p151 = scmp.eq.s32.totalorder %s24, 1
      %p152 = por %p150, %p151
      %p154 = scmp.ne.s32.totalorder %s139, %s153
      %p155 = scmp.eq.s32.totalorder %s24, 0
      %p156 = por %p154, %p155
      %s158 = sadd.s32 %s157, 1
      %p161 = scmp.eq.s32.totalorder %s18, 1
      %p162 = scmp.ne.s32.totalorder %s157, %s159
      %p163 = scmp.eq.s32.totalorder %s18, 0
      %p164 = por %p162, %p163
      %p165 = scmp.ne.s32.totalorder %s157, %s159
      %p166 = scmp.eq.s32.totalorder %s23, 1
      %p167 = por %p165, %p166
      %p168 = scmp.ne.s32.totalorder %s159, %s160
      %p169 = scmp.eq.s32.totalorder %s23, 0
      %p170 = por %p168, %p169
      %p171 = scmp.ne.s32.totalorder %s159, %s160
      %p172 = scmp.eq.s32.totalorder %s24, 1
      %p173 = por %p171, %p172
      %p175 = scmp.ne.s32.totalorder %s160, %s174
      %p176 = scmp.eq.s32.totalorder %s24, 0
      %p177 = por %p175, %p176
      %s178 = ssub.s32 %s18, %s25
      %p179 = scmp.eq.s32.totalorder %s178, 0
      %s181 = sadd.s32 %s180, 1
      %s182 = scalar_select %p179, %s180, %s181
      %p185 = pneg %p179
      %p186 = scmp.eq.s32.totalorder %s18, 1
      %p187 = por %p185, %p186
      %p188 = scmp.ne.s32.totalorder %s180, %s183
      %p189 = scmp.eq.s32.totalorder %s18, 0
      %p190 = por %p188, %p189
      %p191 = scmp.ne.s32.totalorder %s180, %s183
      %p192 = scmp.eq.s32.totalorder %s23, 1
      %p193 = por %p191, %p192
      %p194 = scmp.ne.s32.totalorder %s183, %s184
      %p195 = scmp.eq.s32.totalorder %s23, 0
      %p196 = por %p194, %p195
      %p197 = scmp.ne.s32.totalorder %s183, %s184
      %p198 = scmp.eq.s32.totalorder %s24, 1
      %p199 = por %p197, %p198
      %p201 = scmp.ne.s32.totalorder %s184, %s200
      %p202 = scmp.eq.s32.totalorder %s24, 0
      %p203 = por %p201, %p202
      %p204 = scmp.le.s32.totalorder 1, %s18
      %p205 = scmp.lt.s32.totalorder %s18, 3
      %p206 = pnand %p204, %p205
      %p207 = pneg %p206
      // Predicated region
      $region9: #{tpu_custom_call.1} parent=5 // pred_check
        _
      $region10: #{tpu_custom_call.1} parent=5 // pred_check_branch
        %209 = sbr.rel (%p206) target = $region12
      $region11: #{tpu_custom_call.1} parent=5 // pred_region
        %s210 = ssub.s32 %s18, 1
        // Predicated region
        $region13: #{tpu_custom_call.1} parent=11 // pred_check
          %p211 = pneg %p65
        $region14: #{tpu_custom_call.1} parent=11 // pred_check_branch
          %213 = sbr.rel (%p211) target = $region16
        $region15: #{tpu_custom_call.1} parent=11 // pred_region
          _
        $region16: #{tpu_custom_call.1} parent=11 // pred_fallthru
          _
        // Predicated region
        $region17: #{tpu_custom_call.1} parent=11 // pred_check
          %p214 = pneg %p86
        $region18: #{tpu_custom_call.1} parent=11 // pred_check_branch
          %216 = sbr.rel (%p214) target = $region20
        $region19: #{tpu_custom_call.1} parent=11 // pred_region
          _
        $region20: #{tpu_custom_call.1} parent=11 // pred_fallthru
          _
        // Predicated region
        $region21: #{tpu_custom_call.1} parent=11 // pred_check
          %p217 = pneg %p107
        $region22: #{tpu_custom_call.1} parent=11 // pred_check_branch
          %219 = sbr.rel (%p217) target = $region24
        $region23: #{tpu_custom_call.1} parent=11 // pred_region
          _
        $region24: #{tpu_custom_call.1} parent=11 // pred_fallthru
          _
        // Predicated region
        $region25: #{tpu_custom_call.1} parent=11 // pred_check
          %p220 = pneg %p128
        $region26: #{tpu_custom_call.1} parent=11 // pred_check_branch
          %222 = sbr.rel (%p220) target = $region28
        $region27: #{tpu_custom_call.1} parent=11 // pred_region
          _
        $region28: #{tpu_custom_call.1} parent=11 // pred_fallthru
          _
        // Predicated region
        $region29: #{tpu_custom_call.1} parent=11 // pred_check
          %p223 = pneg %p149
        $region30: #{tpu_custom_call.1} parent=11 // pred_check_branch
          %225 = sbr.rel (%p223) target = $region32
        $region31: #{tpu_custom_call.1} parent=11 // pred_region
          _
        $region32: #{tpu_custom_call.1} parent=11 // pred_fallthru
          _
        // Predicated region
        $region33: #{tpu_custom_call.1} parent=11 // pred_check
          %p226 = pneg %p170
        $region34: #{tpu_custom_call.1} parent=11 // pred_check_branch
          %228 = sbr.rel (%p226) target = $region36
        $region35: #{tpu_custom_call.1} parent=11 // pred_region
          _
        $region36: #{tpu_custom_call.1} parent=11 // pred_fallthru
          _
      $region12: #{tpu_custom_call.1} parent=5 // pred_fallthru
        _
      %p229 = scmp.lt.s32.totalorder %s18, 2
      // Predicated region
      $region37: #{tpu_custom_call.1} parent=5 // pred_check
        %p230 = pneg %p229
      $region38: #{tpu_custom_call.1} parent=5 // pred_check_branch
        %232 = sbr.rel (%p230) target = $region40
      $region39: #{tpu_custom_call.1} parent=5 // pred_region
        // Predicated region
        $region41: #{tpu_custom_call.1} parent=39 // pred_check
          %p233 = pneg %p38
        $region42: #{tpu_custom_call.1} parent=39 // pred_check_branch
          %235 = sbr.rel (%p233) target = $region44
        $region43: #{tpu_custom_call.1} parent=39 // pred_region
          %s236 = smul.u32 2, %s18
          %p237 = scmp.lt.s32.totalorder %s236, 3
          %s238 = scalar_select %p237, %s236, 3
          %s239 = smul.addr %s238, 2
          %s240 = scalar_lea.vmem %s0, %s239
          %s241 = smul.u32 2, %s18
        $region44: #{tpu_custom_call.1} parent=39 // pred_fallthru
          _
      $region40: #{tpu_custom_call.1} parent=5 // pred_fallthru
        _
      %p242 = scmp.le.s32.totalorder 1, %s18
      %p243 = scmp.lt.s32.totalorder %s18, 3
      %p244 = pnand %p242, %p243
      %p245 = pneg %p244
      // Predicated region
      $region45: #{tpu_custom_call.1} parent=5 // pred_check
        _
      $region46: #{tpu_custom_call.1} parent=5 // pred_check_branch
        %247 = sbr.rel (%p244) target = $region48
      $region47: #{tpu_custom_call.1} parent=5 // pred_region
        %s248 = ssub.s32 %s18, 1
        %s249 = smul.u32 2, %s23
        %p250 = scmp.lt.s32.totalorder %s249, 3
        %s251 = scalar_select %p250, %s249, 3
        %s252 = smul.addr %s251, 2
        %s253 = scalar_lea.vmem %s0, %s252
        %p254 = pneg %p44
        %p255 = pneg %p41
        %p256 = pneg %p65
        %p257 = pneg %p62
        %p258 = pneg %p86
        %p259 = pneg %p83
        %p260 = pneg %p107
        %p261 = pneg %p104
        %p262 = pneg %p128
        %p263 = pneg %p125
        %p264 = pneg %p149
        %p265 = pneg %p146
        %p266 = pneg %p170
        %p267 = pneg %p167
        %p268 = pneg %p196
        %p269 = pneg %p193
        %s270 = sand.u32 %s183, 1
        %s271 = scalar_lea.sflag [#allocation4], %s270
        %s272 = sand.u32 %s183, 1
        %s273 = smul.addr %s272, 2
        %s274 = scalar_lea.vmem [#allocation3], %s273
        %s275 = smul.u32 2, %s23
        %p276 = scmp.lt.s32.totalorder %s275, 3
        %s277 = scalar_select %p276, %s275, 3
        %s278 = smul.addr %s277, 2
        %s279 = scalar_lea.vmem %s0, %s278
        %s280 = smul.u32 2, %s23
        %s281 = smul.u32 2, %s23
        %v282 = vld [vmem:[%s1] sm:$0xff]
        %v283 = vld [vmem:[%s1 + $0x8] sm:$0xff]
        %v284 = vld [vmem:[%s1 + $0x10] sm:$0xff]
        %v285 = vld [vmem:[%s1 + $0x18] sm:$0xff]
        %v286 = vld [vmem:[%s2] sm:$0xff]
        %v287 = vld [vmem:[%s2 + $0x8] sm:$0xff]
        %v288 = vld [vmem:[%s2 + $0x10] sm:$0xff]
        %v289 = vld [vmem:[%s2 + $0x18] sm:$0xff]
        %v290 = vld [vmem:[%s3] sm:$0xff]
        %v291 = vld [vmem:[%s3 + $0x8] sm:$0xff]
        %v292 = vld [vmem:[%s3 + $0x10] sm:$0xff]
        %v293 = vld [vmem:[%s3 + $0x18] sm:$0xff]
        %v294 = vld [vmem:[%s4] sm:$0xff]
        %v295 = vld [vmem:[%s4 + $0x8] sm:$0xff]
        %v296 = vld [vmem:[%s4 + $0x10] sm:$0xff]
        %v297 = vld [vmem:[%s4 + $0x18] sm:$0xff]
        %v298 = vld [vmem:[%s5] sm:$0x1]
        %v299 = vld [vmem:[#allocation2] sm:$0x1]
        %v300 = vld [vmem:[%s279] sm:$0xf]
        %302 = vset.pattern.permute.xlu0 0
        %303 = vperm.xlu0 %302, %v286
        %v304 = vpop.permute.xlu0 %303
        %307 = vset.pattern.permute.xlu0 0
        %308 = vperm.xlu0 %307, %v287
        %v309 = vpop.permute.xlu0 %308
        %312 = vset.pattern.permute.xlu0 0
        %313 = vperm.xlu0 %312, %v288
        %v314 = vpop.permute.xlu0 %313
        %317 = vset.pattern.permute.xlu0 0
        %318 = vperm.xlu0 %317, %v289
        %v319 = vpop.permute.xlu0 %318
        %v323 = vunpack.c.l.s4 1983009808
        %v324 = vunpack.c.0.s8 %v323
        %v325 = vlaneseq
        %v326 = vshrl.u32 %v325, 7
        %v327 = vsub.s32 %v324, %v326
        %v328 = vrot.slane %v300, %v327
        %v329 = vcombine.high %v328, %v328
        %vm330 = vcmask 15360
        %v332 = vsel %vm330, %v282, 0
        %v335 = vsel %vm330, %v283, 0
        %v338 = vsel %vm330, %v284, 0
        %v341 = vsel %vm330, %v285, 0
        %vm343 = vcmask 1041408
        %v344 = vsel %vm343, %v328, 0
        %v346 = vsel %vm343, %v329, 0
        %348 = vmatprep.subr.mxu0 0.0
        %349 = vmatpush1.msra.mxu0 0.0
        %350 = vmatprep.subr.mxu0 0.0
        %351 = vmatpush1.msra.mxu0 0.0
        %352 = vmatprep.subr.mxu0 0.0
        %353 = vmatpush1.msra.mxu0 0.0
        %354 = vmatprep.subr.mxu0 0.0
        %355 = vmatpush1.msra.mxu0 0.0
        %356 = vmatprep.subr.mxu0 0.0
        %357 = vmatpush1.msra.mxu0 0.0
        %358 = vmatprep.subr.mxu0 0.0
        %359 = vmatpush1.msra.mxu0 0.0
        %360 = vmatprep.subr.mxu0 0.0
        %361 = vmatpush1.msra.mxu0 0.0
        %362 = vmatprep.subr.mxu0 0.0
        %363 = vmatpush1.msra.mxu0 0.0
        %364 = vmatprep.subr.mxu0 0.0
        %365 = vmatpush1.msra.mxu0 0.0
        %366 = vmatprep.subr.mxu0 0.0
        %367 = vmatpush1.msra.mxu0 0.0
        %368 = vmatprep.subr.mxu0 0.0
        %369 = vmatpush1.msra.mxu0 0.0
        %370 = vmatprep.subr.mxu0 0.0
        %371 = vmatpush1.msra.mxu0 0.0
        %372 = vmatprep.subr.mxu0 0.0
        %373 = vmatpush1.msra.mxu0 0.0
        %374 = vmatprep.subr.mxu0 0.0
        %375 = vmatpush1.msra.mxu0 0.0
        %376 = vmatprep.subr.mxu0 0.0
        %377 = vmatpush1.msra.mxu0 0.0
        %378 = vmatprep.subr.mxu0 %v346
        %379 = vmatpush1.msra.mxu0 %v344
        %380 = vmatprep.subr.mxu0 0.0
        %381 = vmatpush2.msra.mxu0 0.0
        %382 = vmatprep.subr.mxu0 0.0
        %383 = vmatpush2.msra.mxu0 0.0
        %384 = vmatprep.subr.mxu0 0.0
        %385 = vmatpush2.msra.mxu0 0.0
        %386 = vmatprep.subr.mxu0 0.0
        %387 = vmatpush2.msra.mxu0 0.0
        %388 = vmatprep.subr.mxu0 0.0
        %389 = vmatpush2.msra.mxu0 0.0
        %390 = vmatprep.subr.mxu0 0.0
        %391 = vmatpush2.msra.mxu0 0.0
        %392 = vmatprep.subr.mxu0 0.0
        %393 = vmatpush2.msra.mxu0 0.0
        %394 = vmatprep.subr.mxu0 0.0
        %395 = vmatpush2.msra.mxu0 0.0
        %396 = vmatprep.subr.mxu0 0.0
        %397 = vmatpush2.msra.mxu0 0.0
        %398 = vmatprep.subr.mxu0 0.0
        %399 = vmatpush2.msra.mxu0 0.0
        %400 = vmatprep.subr.mxu0 0.0
        %401 = vmatpush2.msra.mxu0 0.0
        %402 = vmatprep.subr.mxu0 0.0
        %403 = vmatpush2.msra.mxu0 0.0
        %404 = vmatprep.subr.mxu0 0.0
        %405 = vmatpush2.msra.mxu0 0.0
        %406 = vmatprep.subr.mxu0 0.0
        %407 = vmatpush2.msra.mxu0 0.0
        %408 = vmatprep.subr.mxu0 0.0
        %409 = vmatpush2.msra.mxu0 0.0
        %410 = vmatprep.subr.mxu0 0.0
        %411 = vmatpush2.msra.mxu0 0.0
        %412 = vmatprep.mubr.f32.mxu0 0.0
        %413 = vmatmul.mubr.f32.gmra.mxu0 %v332
        %v414 = vpop.f32.mrf.mxu0
        %v415 = vadd.f32 %v304, %v414
        %v416 = vpop.f32.mrf.mxu0
        %v417 = vadd.f32 %v304, %v416
        %418 = vmatprep.mubr.f32.mxu0 0.0
        %419 = vmatmul.mubr.f32.gmra.mxu0 %v335
        %v420 = vpop.f32.mrf.mxu0
        %v421 = vadd.f32 %v309, %v420
        %v422 = vpop.f32.mrf.mxu0
        %v423 = vadd.f32 %v309, %v422
        %424 = vmatprep.mubr.f32.mxu0 0.0
        %425 = vmatmul.mubr.f32.gmra.mxu0 %v338
        %v426 = vpop.f32.mrf.mxu0
        %v427 = vadd.f32 %v314, %v426
        %v428 = vpop.f32.mrf.mxu0
        %v429 = vadd.f32 %v314, %v428
        %430 = vmatprep.mubr.f32.mxu0 0.0
        %431 = vmatmul.mubr.f32.gmra.mxu0 %v341
        %v432 = vpop.f32.mrf.mxu0
        %v433 = vadd.f32 %v319, %v432
        %v434 = vpop.f32.mrf.mxu0
        %v435 = vadd.f32 %v319, %v434
        %436 = vdwg.mxu0
        %v437 = vmul.f32 %v415, 30.0
        %v438 = vmul.f32 %v417, 30.0
        %v439 = vmul.f32 %v421, 30.0
        %v440 = vmul.f32 %v423, 30.0
        %v441 = vmul.f32 %v427, 30.0
        %v442 = vmul.f32 %v429, 30.0
        %v443 = vmul.f32 %v433, 30.0
        %v444 = vmul.f32 %v435, 30.0
        %v445 = vmul.f32 %v437, 0.31830987
        %v446 = vmul.f32 %v438, 0.31830987
        %v447 = vmul.f32 %v439, 0.31830987
        %v448 = vmul.f32 %v440, 0.31830987
        %v449 = vmul.f32 %v441, 0.31830987
        %v450 = vmul.f32 %v442, 0.31830987
        %v451 = vmul.f32 %v443, 0.31830987
        %v452 = vmul.f32 %v444, 0.31830987
        %v453 = vadd.f32 %v445, 0.5
        %v454 = vadd.f32 %v446, 0.5
        %v455 = vadd.f32 %v447, 0.5
        %v456 = vadd.f32 %v448, 0.5
        %v457 = vadd.f32 %v449, 0.5
        %v458 = vadd.f32 %v450, 0.5
        %v459 = vadd.f32 %v451, 0.5
        %v460 = vadd.f32 %v452, 0.5
        %v461 = vfloor.f32 %v453
        %v462 = vfloor.f32 %v454
        %v463 = vfloor.f32 %v455
        %v464 = vfloor.f32 %v456
        %v465 = vfloor.f32 %v457
        %v466 = vfloor.f32 %v458
        %v467 = vfloor.f32 %v459
        %v468 = vfloor.f32 %v460
        %v469 = vmul.f32 %v461, 3.140625
        %v470 = vmul.f32 %v462, 3.140625
        %v471 = vmul.f32 %v463, 3.140625
        %v472 = vmul.f32 %v464, 3.140625
        %v473 = vmul.f32 %v465, 3.140625
        %v474 = vmul.f32 %v466, 3.140625
        %v475 = vmul.f32 %v467, 3.140625
        %v476 = vmul.f32 %v468, 3.140625
        %v477 = vsub.f32 %v437, %v469
        %v478 = vsub.f32 %v438, %v470
        %v479 = vsub.f32 %v439, %v471
        %v480 = vsub.f32 %v440, %v472
        %v481 = vsub.f32 %v441, %v473
        %v482 = vsub.f32 %v442, %v474
        %v483 = vsub.f32 %v443, %v475
        %v484 = vsub.f32 %v444, %v476
        %v485 = vmul.f32 %v461, 0.0009675026
        %v486 = vmul.f32 %v462, 0.0009675026
        %v487 = vmul.f32 %v463, 0.0009675026
        %v488 = vmul.f32 %v464, 0.0009675026
        %v489 = vmul.f32 %v465, 0.0009675026
        %v490 = vmul.f32 %v466, 0.0009675026
        %v491 = vmul.f32 %v467, 0.0009675026
        %v492 = vmul.f32 %v468, 0.0009675026
        %v493 = vsub.f32 %v477, %v485
        %v494 = vsub.f32 %v478, %v486
        %v495 = vsub.f32 %v479, %v487
        %v496 = vsub.f32 %v480, %v488
        %v497 = vsub.f32 %v481, %v489
        %v498 = vsub.f32 %v482, %v490
        %v499 = vsub.f32 %v483, %v491
        %v500 = vsub.f32 %v484, %v492
        %v501 = vmul.f32 %v461, 1.509958e-07
        %v502 = vmul.f32 %v462, 1.509958e-07
        %v503 = vmul.f32 %v463, 1.509958e-07
        %v504 = vmul.f32 %v464, 1.509958e-07
        %v505 = vmul.f32 %v465, 1.509958e-07
        %v506 = vmul.f32 %v466, 1.509958e-07
        %v507 = vmul.f32 %v467, 1.509958e-07
        %v508 = vmul.f32 %v468, 1.509958e-07
        %v509 = vsub.f32 %v493, %v501
        %v510 = vsub.f32 %v494, %v502
        %v511 = vsub.f32 %v495, %v503
        %v512 = vsub.f32 %v496, %v504
        %v513 = vsub.f32 %v497, %v505
        %v514 = vsub.f32 %v498, %v506
        %v515 = vsub.f32 %v499, %v507
        %v516 = vsub.f32 %v500, %v508
        %v517 = vmul.f32 %v509, %v509
        %v518 = vmul.f32 %v510, %v510
        %v519 = vmul.f32 %v511, %v511
        %v520 = vmul.f32 %v512, %v512
        %v521 = vmul.f32 %v513, %v513
        %v522 = vmul.f32 %v514, %v514
        %v523 = vmul.f32 %v515, %v515
        %v524 = vmul.f32 %v516, %v516
        %v525 = vmul.f32 %v517, -2.5052108e-08
        %v526 = vmul.f32 %v518, -2.5052108e-08
        %v527 = vmul.f32 %v519, -2.5052108e-08
        %v528 = vmul.f32 %v520, -2.5052108e-08
        %v529 = vmul.f32 %v521, -2.5052108e-08
        %v530 = vmul.f32 %v522, -2.5052108e-08
        %v531 = vmul.f32 %v523, -2.5052108e-08
        %v532 = vmul.f32 %v524, -2.5052108e-08
        %v533 = vadd.f32 %v525, 2.7557319e-06
        %v534 = vadd.f32 %v526, 2.7557319e-06
        %v535 = vadd.f32 %v527, 2.7557319e-06
        %v536 = vadd.f32 %v528, 2.7557319e-06
        %v537 = vadd.f32 %v529, 2.7557319e-06
        %v538 = vadd.f32 %v530, 2.7557319e-06
        %v539 = vadd.f32 %v531, 2.7557319e-06
        %v540 = vadd.f32 %v532, 2.7557319e-06
        %v541 = vmul.f32 %v533, %v517
        %v542 = vmul.f32 %v534, %v518
        %v543 = vmul.f32 %v535, %v519
        %v544 = vmul.f32 %v536, %v520
        %v545 = vmul.f32 %v537, %v521
        %v546 = vmul.f32 %v538, %v522
        %v547 = vmul.f32 %v539, %v523
        %v548 = vmul.f32 %v540, %v524
        %v549 = vadd.f32 %v541, -0.0001984127
        %v550 = vadd.f32 %v542, -0.0001984127
        %v551 = vadd.f32 %v543, -0.0001984127
        %v552 = vadd.f32 %v544, -0.0001984127
        %v553 = vadd.f32 %v545, -0.0001984127
        %v554 = vadd.f32 %v546, -0.0001984127
        %v555 = vadd.f32 %v547, -0.0001984127
        %v556 = vadd.f32 %v548, -0.0001984127
        %v557 = vmul.f32 %v549, %v517
        %v558 = vmul.f32 %v550, %v518
        %v559 = vmul.f32 %v551, %v519
        %v560 = vmul.f32 %v552, %v520
        %v561 = vmul.f32 %v553, %v521
        %v562 = vmul.f32 %v554, %v522
        %v563 = vmul.f32 %v555, %v523
        %v564 = vmul.f32 %v556, %v524
        %v565 = vadd.f32 %v557, 0.008333334
        %v566 = vadd.f32 %v558, 0.008333334
        %v567 = vadd.f32 %v559, 0.008333334
        %v568 = vadd.f32 %v560, 0.008333334
        %v569 = vadd.f32 %v561, 0.008333334
        %v570 = vadd.f32 %v562, 0.008333334
        %v571 = vadd.f32 %v563, 0.008333334
        %v572 = vadd.f32 %v564, 0.008333334
        %v573 = vmul.f32 %v565, %v517
        %v574 = vmul.f32 %v566, %v518
        %v575 = vmul.f32 %v567, %v519
        %v576 = vmul.f32 %v568, %v520
        %v577 = vmul.f32 %v569, %v521
        %v578 = vmul.f32 %v570, %v522
        %v579 = vmul.f32 %v571, %v523
        %v580 = vmul.f32 %v572, %v524
        %v581 = vadd.f32 %v573, -0.16666667
        %v582 = vadd.f32 %v574, -0.16666667
        %v583 = vadd.f32 %v575, -0.16666667
        %v584 = vadd.f32 %v576, -0.16666667
        %v585 = vadd.f32 %v577, -0.16666667
        %v586 = vadd.f32 %v578, -0.16666667
        %v587 = vadd.f32 %v579, -0.16666667
        %v588 = vadd.f32 %v580, -0.16666667
        %v589 = vmul.f32 %v517, %v581
        %v590 = vmul.f32 %v518, %v582
        %v591 = vmul.f32 %v519, %v583
        %v592 = vmul.f32 %v520, %v584
        %v593 = vmul.f32 %v521, %v585
        %v594 = vmul.f32 %v522, %v586
        %v595 = vmul.f32 %v523, %v587
        %v596 = vmul.f32 %v524, %v588
        %v597 = vmul.f32 %v509, %v589
        %v598 = vmul.f32 %v510, %v590
        %v599 = vmul.f32 %v511, %v591
        %v600 = vmul.f32 %v512, %v592
        %v601 = vmul.f32 %v513, %v593
        %v602 = vmul.f32 %v514, %v594
        %v603 = vmul.f32 %v515, %v595
        %v604 = vmul.f32 %v516, %v596
        %v605 = vadd.f32 %v509, %v597
        %v606 = vadd.f32 %v510, %v598
        %v607 = vadd.f32 %v511, %v599
        %v608 = vadd.f32 %v512, %v600
        %v609 = vadd.f32 %v513, %v601
        %v610 = vadd.f32 %v514, %v602
        %v611 = vadd.f32 %v515, %v603
        %v612 = vadd.f32 %v516, %v604
        %v613 = vmul.f32 %v461, 0.5
        %v614 = vmul.f32 %v462, 0.5
        %v615 = vmul.f32 %v463, 0.5
        %v616 = vmul.f32 %v464, 0.5
        %v617 = vmul.f32 %v465, 0.5
        %v618 = vmul.f32 %v466, 0.5
        %v619 = vmul.f32 %v467, 0.5
        %v620 = vmul.f32 %v468, 0.5
        %v621 = vfloor.f32 %v613
        %v622 = vfloor.f32 %v614
        %v623 = vfloor.f32 %v615
        %v624 = vfloor.f32 %v616
        %v625 = vfloor.f32 %v617
        %v626 = vfloor.f32 %v618
        %v627 = vfloor.f32 %v619
        %v628 = vfloor.f32 %v620
        %v629 = vsub.f32 %v613, %v621
        %v630 = vsub.f32 %v614, %v622
        %v631 = vsub.f32 %v615, %v623
        %v632 = vsub.f32 %v616, %v624
        %v633 = vsub.f32 %v617, %v625
        %v634 = vsub.f32 %v618, %v626
        %v635 = vsub.f32 %v619, %v627
        %v636 = vsub.f32 %v620, %v628
        %vm637 = vcmp.gt.f32.partialorder %v629, 0.25
        %vm638 = vcmp.gt.f32.partialorder %v630, 0.25
        %vm639 = vcmp.gt.f32.partialorder %v631, 0.25
        %vm640 = vcmp.gt.f32.partialorder %v632, 0.25
        %vm641 = vcmp.gt.f32.partialorder %v633, 0.25
        %vm642 = vcmp.gt.f32.partialorder %v634, 0.25
        %vm643 = vcmp.gt.f32.partialorder %v635, 0.25
        %vm644 = vcmp.gt.f32.partialorder %v636, 0.25
        %v645 = vsub.f32 0.0, %v605
        %v646 = vsub.f32 0.0, %v606
        %v647 = vsub.f32 0.0, %v607
        %v648 = vsub.f32 0.0, %v608
        %v649 = vsub.f32 0.0, %v609
        %v650 = vsub.f32 0.0, %v610
        %v651 = vsub.f32 0.0, %v611
        %v652 = vsub.f32 0.0, %v612
        %v653 = vsel %vm637, %v645, %v605
        %v654 = vsel %vm638, %v646, %v606
        %v655 = vsel %vm639, %v647, %v607
        %v656 = vsel %vm640, %v648, %v608
        %v657 = vsel %vm641, %v649, %v609
        %v658 = vsel %vm642, %v650, %v610
        %v659 = vsel %vm643, %v651, %v611
        %v660 = vsel %vm644, %v652, %v612
        %662 = vset.pattern.permute.xlu0 0
        %663 = vperm.xlu0 %662, %v294
        %v664 = vpop.permute.xlu0 %663
        %667 = vset.pattern.permute.xlu0 0
        %668 = vperm.xlu0 %667, %v295
        %v669 = vpop.permute.xlu0 %668
        %672 = vset.pattern.permute.xlu0 0
        %673 = vperm.xlu0 %672, %v296
        %v674 = vpop.permute.xlu0 %673
        %677 = vset.pattern.permute.xlu0 0
        %678 = vperm.xlu0 %677, %v297
        %v679 = vpop.permute.xlu0 %678
        %vm681 = vcmask 261120
        %v683 = vsel %vm681, %v290, 0
        %v686 = vsel %vm681, %v291, 0
        %v689 = vsel %vm681, %v292, 0
        %v692 = vsel %vm681, %v293, 0
        %694 = vmatprep.subr.mxu0 0.0
        %695 = vmatpush1.msra.mxu0 0.0
        %696 = vmatprep.subr.mxu0 0.0
        %697 = vmatpush1.msra.mxu0 0.0
        %698 = vmatprep.subr.mxu0 0.0
        %699 = vmatpush1.msra.mxu0 0.0
        %700 = vmatprep.subr.mxu0 0.0
        %701 = vmatpush1.msra.mxu0 0.0
        %702 = vmatprep.subr.mxu0 0.0
        %703 = vmatpush1.msra.mxu0 0.0
        %704 = vmatprep.subr.mxu0 0.0
        %705 = vmatpush1.msra.mxu0 0.0
        %706 = vmatprep.subr.mxu0 0.0
        %707 = vmatpush1.msra.mxu0 0.0
        %708 = vmatprep.subr.mxu0 0.0
        %709 = vmatpush1.msra.mxu0 0.0
        %710 = vmatprep.subr.mxu0 0.0
        %711 = vmatpush1.msra.mxu0 0.0
        %712 = vmatprep.subr.mxu0 0.0
        %713 = vmatpush1.msra.mxu0 0.0
        %714 = vmatprep.subr.mxu0 0.0
        %715 = vmatpush1.msra.mxu0 0.0
        %716 = vmatprep.subr.mxu0 0.0
        %717 = vmatpush1.msra.mxu0 0.0
        %718 = vmatprep.subr.mxu0 %v660
        %719 = vmatpush1.msra.mxu0 %v659
        %720 = vmatprep.subr.mxu0 %v658
        %721 = vmatpush1.msra.mxu0 %v657
        %722 = vmatprep.subr.mxu0 %v656
        %723 = vmatpush1.msra.mxu0 %v655
        %724 = vmatprep.subr.mxu0 %v654
        %725 = vmatpush1.msra.mxu0 %v653
        %726 = vmatprep.subr.mxu0 0.0
        %727 = vmatpush2.msra.mxu0 0.0
        %728 = vmatprep.subr.mxu0 0.0
        %729 = vmatpush2.msra.mxu0 0.0
        %730 = vmatprep.subr.mxu0 0.0
        %731 = vmatpush2.msra.mxu0 0.0
        %732 = vmatprep.subr.mxu0 0.0
        %733 = vmatpush2.msra.mxu0 0.0
        %734 = vmatprep.subr.mxu0 0.0
        %735 = vmatpush2.msra.mxu0 0.0
        %736 = vmatprep.subr.mxu0 0.0
        %737 = vmatpush2.msra.mxu0 0.0
        %738 = vmatprep.subr.mxu0 0.0
        %739 = vmatpush2.msra.mxu0 0.0
        %740 = vmatprep.subr.mxu0 0.0
        %741 = vmatpush2.msra.mxu0 0.0
        %742 = vmatprep.subr.mxu0 0.0
        %743 = vmatpush2.msra.mxu0 0.0
        %744 = vmatprep.subr.mxu0 0.0
        %745 = vmatpush2.msra.mxu0 0.0
        %746 = vmatprep.subr.mxu0 0.0
        %747 = vmatpush2.msra.mxu0 0.0
        %748 = vmatprep.subr.mxu0 0.0
        %749 = vmatpush2.msra.mxu0 0.0
        %750 = vmatprep.subr.mxu0 0.0
        %751 = vmatpush2.msra.mxu0 0.0
        %752 = vmatprep.subr.mxu0 0.0
        %753 = vmatpush2.msra.mxu0 0.0
        %754 = vmatprep.subr.mxu0 0.0
        %755 = vmatpush2.msra.mxu0 0.0
        %756 = vmatprep.subr.mxu0 0.0
        %757 = vmatpush2.msra.mxu0 0.0
        %758 = vmatprep.mubr.f32.mxu0 0.0
        %759 = vmatmul.mubr.f32.gmra.mxu0 %v683
        %v760 = vpop.f32.mrf.mxu0
        %v761 = vadd.f32 %v664, %v760
        %v762 = vpop.f32.mrf.mxu0
        %v763 = vadd.f32 %v664, %v762
        %764 = vmatprep.mubr.f32.mxu0 0.0
        %765 = vmatmul.mubr.f32.gmra.mxu0 %v686
        %v766 = vpop.f32.mrf.mxu0
        %v767 = vadd.f32 %v669, %v766
        %v768 = vpop.f32.mrf.mxu0
        %v769 = vadd.f32 %v669, %v768
        %770 = vmatprep.mubr.f32.mxu0 0.0
        %771 = vmatmul.mubr.f32.gmra.mxu0 %v689
        %v772 = vpop.f32.mrf.mxu0
        %v773 = vadd.f32 %v674, %v772
        %v774 = vpop.f32.mrf.mxu0
        %v775 = vadd.f32 %v674, %v774
        %776 = vmatprep.mubr.f32.mxu0 0.0
        %777 = vmatmul.mubr.f32.gmra.mxu0 %v692
        %v778 = vpop.f32.mrf.mxu0
        %v779 = vadd.f32 %v679, %v778
        %v780 = vpop.f32.mrf.mxu0
        %v781 = vadd.f32 %v679, %v780
        %782 = vdwg.mxu0
        %v783 = vmul.f32 %v761, 30.0
        %v784 = vmul.f32 %v763, 30.0
        %v785 = vmul.f32 %v767, 30.0
        %v786 = vmul.f32 %v769, 30.0
        %v787 = vmul.f32 %v773, 30.0
        %v788 = vmul.f32 %v775, 30.0
        %v789 = vmul.f32 %v779, 30.0
        %v790 = vmul.f32 %v781, 30.0
        %v791 = vmul.f32 %v783, 0.31830987
        %v792 = vmul.f32 %v784, 0.31830987
        %v793 = vmul.f32 %v785, 0.31830987
        %v794 = vmul.f32 %v786, 0.31830987
        %v795 = vmul.f32 %v787, 0.31830987
        %v796 = vmul.f32 %v788, 0.31830987
        %v797 = vmul.f32 %v789, 0.31830987
        %v798 = vmul.f32 %v790, 0.31830987
        %v799 = vadd.f32 %v791, 0.5
        %v800 = vadd.f32 %v792, 0.5
        %v801 = vadd.f32 %v793, 0.5
        %v802 = vadd.f32 %v794, 0.5
        %v803 = vadd.f32 %v795, 0.5
        %v804 = vadd.f32 %v796, 0.5
        %v805 = vadd.f32 %v797, 0.5
        %v806 = vadd.f32 %v798, 0.5
        %v807 = vfloor.f32 %v799
        %v808 = vfloor.f32 %v800
        %v809 = vfloor.f32 %v801
        %v810 = vfloor.f32 %v802
        %v811 = vfloor.f32 %v803
        %v812 = vfloor.f32 %v804
        %v813 = vfloor.f32 %v805
        %v814 = vfloor.f32 %v806
        %v815 = vmul.f32 %v807, 3.140625
        %v816 = vmul.f32 %v808, 3.140625
        %v817 = vmul.f32 %v809, 3.140625
        %v818 = vmul.f32 %v810, 3.140625
        %v819 = vmul.f32 %v811, 3.140625
        %v820 = vmul.f32 %v812, 3.140625
        %v821 = vmul.f32 %v813, 3.140625
        %v822 = vmul.f32 %v814, 3.140625
        %v823 = vsub.f32 %v783, %v815
        %v824 = vsub.f32 %v784, %v816
        %v825 = vsub.f32 %v785, %v817
        %v826 = vsub.f32 %v786, %v818
        %v827 = vsub.f32 %v787, %v819
        %v828 = vsub.f32 %v788, %v820
        %v829 = vsub.f32 %v789, %v821
        %v830 = vsub.f32 %v790, %v822
        %v831 = vmul.f32 %v807, 0.0009675026
        %v832 = vmul.f32 %v808, 0.0009675026
        %v833 = vmul.f32 %v809, 0.0009675026
        %v834 = vmul.f32 %v810, 0.0009675026
        %v835 = vmul.f32 %v811, 0.0009675026
        %v836 = vmul.f32 %v812, 0.0009675026
        %v837 = vmul.f32 %v813, 0.0009675026
        %v838 = vmul.f32 %v814, 0.0009675026
        %v839 = vsub.f32 %v823, %v831
        %v840 = vsub.f32 %v824, %v832
        %v841 = vsub.f32 %v825, %v833
        %v842 = vsub.f32 %v826, %v834
        %v843 = vsub.f32 %v827, %v835
        %v844 = vsub.f32 %v828, %v836
        %v845 = vsub.f32 %v829, %v837
        %v846 = vsub.f32 %v830, %v838
        %v847 = vmul.f32 %v807, 1.509958e-07
        %v848 = vmul.f32 %v808, 1.509958e-07
        %v849 = vmul.f32 %v809, 1.509958e-07
        %v850 = vmul.f32 %v810, 1.509958e-07
        %v851 = vmul.f32 %v811, 1.509958e-07
        %v852 = vmul.f32 %v812, 1.509958e-07
        %v853 = vmul.f32 %v813, 1.509958e-07
        %v854 = vmul.f32 %v814, 1.509958e-07
        %v855 = vsub.f32 %v839, %v847
        %v856 = vsub.f32 %v840, %v848
        %v857 = vsub.f32 %v841, %v849
        %v858 = vsub.f32 %v842, %v850
        %v859 = vsub.f32 %v843, %v851
        %v860 = vsub.f32 %v844, %v852
        %v861 = vsub.f32 %v845, %v853
        %v862 = vsub.f32 %v846, %v854
        %v863 = vmul.f32 %v855, %v855
        %v864 = vmul.f32 %v856, %v856
        %v865 = vmul.f32 %v857, %v857
        %v866 = vmul.f32 %v858, %v858
        %v867 = vmul.f32 %v859, %v859
        %v868 = vmul.f32 %v860, %v860
        %v869 = vmul.f32 %v861, %v861
        %v870 = vmul.f32 %v862, %v862
        %v871 = vmul.f32 %v863, -2.5052108e-08
        %v872 = vmul.f32 %v864, -2.5052108e-08
        %v873 = vmul.f32 %v865, -2.5052108e-08
        %v874 = vmul.f32 %v866, -2.5052108e-08
        %v875 = vmul.f32 %v867, -2.5052108e-08
        %v876 = vmul.f32 %v868, -2.5052108e-08
        %v877 = vmul.f32 %v869, -2.5052108e-08
        %v878 = vmul.f32 %v870, -2.5052108e-08
        %v879 = vadd.f32 %v871, 2.7557319e-06
        %v880 = vadd.f32 %v872, 2.7557319e-06
        %v881 = vadd.f32 %v873, 2.7557319e-06
        %v882 = vadd.f32 %v874, 2.7557319e-06
        %v883 = vadd.f32 %v875, 2.7557319e-06
        %v884 = vadd.f32 %v876, 2.7557319e-06
        %v885 = vadd.f32 %v877, 2.7557319e-06
        %v886 = vadd.f32 %v878, 2.7557319e-06
        %v887 = vmul.f32 %v879, %v863
        %v888 = vmul.f32 %v880, %v864
        %v889 = vmul.f32 %v881, %v865
        %v890 = vmul.f32 %v882, %v866
        %v891 = vmul.f32 %v883, %v867
        %v892 = vmul.f32 %v884, %v868
        %v893 = vmul.f32 %v885, %v869
        %v894 = vmul.f32 %v886, %v870
        %v895 = vadd.f32 %v887, -0.0001984127
        %v896 = vadd.f32 %v888, -0.0001984127
        %v897 = vadd.f32 %v889, -0.0001984127
        %v898 = vadd.f32 %v890, -0.0001984127
        %v899 = vadd.f32 %v891, -0.0001984127
        %v900 = vadd.f32 %v892, -0.0001984127
        %v901 = vadd.f32 %v893, -0.0001984127
        %v902 = vadd.f32 %v894, -0.0001984127
        %v903 = vmul.f32 %v895, %v863
        %v904 = vmul.f32 %v896, %v864
        %v905 = vmul.f32 %v897, %v865
        %v906 = vmul.f32 %v898, %v866
        %v907 = vmul.f32 %v899, %v867
        %v908 = vmul.f32 %v900, %v868
        %v909 = vmul.f32 %v901, %v869
        %v910 = vmul.f32 %v902, %v870
        %v911 = vadd.f32 %v903, 0.008333334
        %v912 = vadd.f32 %v904, 0.008333334
        %v913 = vadd.f32 %v905, 0.008333334
        %v914 = vadd.f32 %v906, 0.008333334
        %v915 = vadd.f32 %v907, 0.008333334
        %v916 = vadd.f32 %v908, 0.008333334
        %v917 = vadd.f32 %v909, 0.008333334
        %v918 = vadd.f32 %v910, 0.008333334
        %v919 = vmul.f32 %v911, %v863
        %v920 = vmul.f32 %v912, %v864
        %v921 = vmul.f32 %v913, %v865
        %v922 = vmul.f32 %v914, %v866
        %v923 = vmul.f32 %v915, %v867
        %v924 = vmul.f32 %v916, %v868
        %v925 = vmul.f32 %v917, %v869
        %v926 = vmul.f32 %v918, %v870
        %v927 = vadd.f32 %v919, -0.16666667
        %v928 = vadd.f32 %v920, -0.16666667
        %v929 = vadd.f32 %v921, -0.16666667
        %v930 = vadd.f32 %v922, -0.16666667
        %v931 = vadd.f32 %v923, -0.16666667
        %v932 = vadd.f32 %v924, -0.16666667
        %v933 = vadd.f32 %v925, -0.16666667
        %v934 = vadd.f32 %v926, -0.16666667
        %v935 = vmul.f32 %v863, %v927
        %v936 = vmul.f32 %v864, %v928
        %v937 = vmul.f32 %v865, %v929
        %v938 = vmul.f32 %v866, %v930
        %v939 = vmul.f32 %v867, %v931
        %v940 = vmul.f32 %v868, %v932
        %v941 = vmul.f32 %v869, %v933
        %v942 = vmul.f32 %v870, %v934
        %v943 = vmul.f32 %v855, %v935
        %v944 = vmul.f32 %v856, %v936
        %v945 = vmul.f32 %v857, %v937
        %v946 = vmul.f32 %v858, %v938
        %v947 = vmul.f32 %v859, %v939
        %v948 = vmul.f32 %v860, %v940
        %v949 = vmul.f32 %v861, %v941
        %v950 = vmul.f32 %v862, %v942
        %v951 = vadd.f32 %v855, %v943
        %v952 = vadd.f32 %v856, %v944
        %v953 = vadd.f32 %v857, %v945
        %v954 = vadd.f32 %v858, %v946
        %v955 = vadd.f32 %v859, %v947
        %v956 = vadd.f32 %v860, %v948
        %v957 = vadd.f32 %v861, %v949
        %v958 = vadd.f32 %v862, %v950
        %v959 = vmul.f32 %v807, 0.5
        %v960 = vmul.f32 %v808, 0.5
        %v961 = vmul.f32 %v809, 0.5
        %v962 = vmul.f32 %v810, 0.5
        %v963 = vmul.f32 %v811, 0.5
        %v964 = vmul.f32 %v812, 0.5
        %v965 = vmul.f32 %v813, 0.5
        %v966 = vmul.f32 %v814, 0.5
        %v967 = vfloor.f32 %v959
        %v968 = vfloor.f32 %v960
        %v969 = vfloor.f32 %v961
        %v970 = vfloor.f32 %v962
        %v971 = vfloor.f32 %v963
        %v972 = vfloor.f32 %v964
        %v973 = vfloor.f32 %v965
        %v974 = vfloor.f32 %v966
        %v975 = vsub.f32 %v959, %v967
        %v976 = vsub.f32 %v960, %v968
        %v977 = vsub.f32 %v961, %v969
        %v978 = vsub.f32 %v962, %v970
        %v979 = vsub.f32 %v963, %v971
        %v980 = vsub.f32 %v964, %v972
        %v981 = vsub.f32 %v965, %v973
        %v982 = vsub.f32 %v966, %v974
        %vm983 = vcmp.gt.f32.partialorder %v975, 0.25
        %vm984 = vcmp.gt.f32.partialorder %v976, 0.25
        %vm985 = vcmp.gt.f32.partialorder %v977, 0.25
        %vm986 = vcmp.gt.f32.partialorder %v978, 0.25
        %vm987 = vcmp.gt.f32.partialorder %v979, 0.25
        %vm988 = vcmp.gt.f32.partialorder %v980, 0.25
        %vm989 = vcmp.gt.f32.partialorder %v981, 0.25
        %vm990 = vcmp.gt.f32.partialorder %v982, 0.25
        %v991 = vsub.f32 0.0, %v951
        %v992 = vsub.f32 0.0, %v952
        %v993 = vsub.f32 0.0, %v953
        %v994 = vsub.f32 0.0, %v954
        %v995 = vsub.f32 0.0, %v955
        %v996 = vsub.f32 0.0, %v956
        %v997 = vsub.f32 0.0, %v957
        %v998 = vsub.f32 0.0, %v958
        %v999 = vsel %vm983, %v991, %v951
        %v1000 = vsel %vm984, %v992, %v952
        %v1001 = vsel %vm985, %v993, %v953
        %v1002 = vsel %vm986, %v994, %v954
        %v1003 = vsel %vm987, %v995, %v955
        %v1004 = vsel %vm988, %v996, %v956
        %v1005 = vsel %vm989, %v997, %v957
        %v1006 = vsel %vm990, %v998, %v958
        %1008 = vset.pattern.permute.xlu0 0
        %1009 = vperm.xlu0 %1008, %v299
        %v1010 = vpop.permute.xlu0 %1009
        %v1012 = vlaneseq
        %v1013 = vshrl.u32 %v1012, 7
        %v1014 = vsub.s32 0, %v1013
        %v1015 = vrot.slane %v1010, %v1014
        %v1017 = vsel %vm681, %v298, 0
        %1019 = vmatprep.subr.mxu0 0.0
        %1020 = vmatpush1.msra.mxu0 0.0
        %1021 = vmatprep.subr.mxu0 0.0
        %1022 = vmatpush1.msra.mxu0 0.0
        %1023 = vmatprep.subr.mxu0 0.0
        %1024 = vmatpush1.msra.mxu0 0.0
        %1025 = vmatprep.subr.mxu0 0.0
        %1026 = vmatpush1.msra.mxu0 0.0
        %1027 = vmatprep.subr.mxu0 0.0
        %1028 = vmatpush1.msra.mxu0 0.0
        %1029 = vmatprep.subr.mxu0 0.0
        %1030 = vmatpush1.msra.mxu0 0.0
        %1031 = vmatprep.subr.mxu0 0.0
        %1032 = vmatpush1.msra.mxu0 0.0
        %1033 = vmatprep.subr.mxu0 0.0
        %1034 = vmatpush1.msra.mxu0 0.0
        %1035 = vmatprep.subr.mxu0 0.0
        %1036 = vmatpush1.msra.mxu0 0.0
        %1037 = vmatprep.subr.mxu0 0.0
        %1038 = vmatpush1.msra.mxu0 0.0
        %1039 = vmatprep.subr.mxu0 0.0
        %1040 = vmatpush1.msra.mxu0 0.0
        %1041 = vmatprep.subr.mxu0 0.0
        %1042 = vmatpush1.msra.mxu0 0.0
        %1043 = vmatprep.subr.mxu0 %v1006
        %1044 = vmatpush1.msra.mxu0 %v1005
        %1045 = vmatprep.subr.mxu0 %v1004
        %1046 = vmatpush1.msra.mxu0 %v1003
        %1047 = vmatprep.subr.mxu0 %v1002
        %1048 = vmatpush1.msra.mxu0 %v1001
        %1049 = vmatprep.subr.mxu0 %v1000
        %1050 = vmatpush1.msra.mxu0 %v999
        %1051 = vmatprep.subr.mxu0 0.0
        %1052 = vmatpush2.msra.mxu0 0.0
        %1053 = vmatprep.subr.mxu0 0.0
        %1054 = vmatpush2.msra.mxu0 0.0
        %1055 = vmatprep.subr.mxu0 0.0
        %1056 = vmatpush2.msra.mxu0 0.0
        %1057 = vmatprep.subr.mxu0 0.0
        %1058 = vmatpush2.msra.mxu0 0.0
        %1059 = vmatprep.subr.mxu0 0.0
        %1060 = vmatpush2.msra.mxu0 0.0
        %1061 = vmatprep.subr.mxu0 0.0
        %1062 = vmatpush2.msra.mxu0 0.0
        %1063 = vmatprep.subr.mxu0 0.0
        %1064 = vmatpush2.msra.mxu0 0.0
        %1065 = vmatprep.subr.mxu0 0.0
        %1066 = vmatpush2.msra.mxu0 0.0
        %1067 = vmatprep.subr.mxu0 0.0
        %1068 = vmatpush2.msra.mxu0 0.0
        %1069 = vmatprep.subr.mxu0 0.0
        %1070 = vmatpush2.msra.mxu0 0.0
        %1071 = vmatprep.subr.mxu0 0.0
        %1072 = vmatpush2.msra.mxu0 0.0
        %1073 = vmatprep.subr.mxu0 0.0
        %1074 = vmatpush2.msra.mxu0 0.0
        %1075 = vmatprep.subr.mxu0 0.0
        %1076 = vmatpush2.msra.mxu0 0.0
        %1077 = vmatprep.subr.mxu0 0.0
        %1078 = vmatpush2.msra.mxu0 0.0
        %1079 = vmatprep.subr.mxu0 0.0
        %1080 = vmatpush2.msra.mxu0 0.0
        %1081 = vmatprep.subr.mxu0 0.0
        %1082 = vmatpush2.msra.mxu0 0.0
        %1083 = vmatprep.mubr.f32.mxu0 0.0
        %1084 = vmatmul.mubr.f32.gmra.mxu0 %v1017
        %v1085 = vpop.f32.mrf.mxu0
        %v1086 = vadd.f32 %v1015, %v1085
        %v1087 = vpop.f32.mrf.mxu0
        %v1088 = vadd.f32 %v1015, %v1087
        %1089 = vdwg.mxu0
        %v1092 = vcombine.low %v1086, %v1088
        %v1094 = vunpack.c.l.s4 1966171168
        %v1095 = vunpack.c.0.s8 %v1094
        %v1096 = vlaneseq
        %v1097 = vshrl.u32 %v1096, 7
        %v1098 = vsub.s32 %v1095, %v1097
        %v1099 = vrot.slane %v1092, %v1098
        %v1101 = vunpack.c.l.s4 1966171168
        %v1102 = vunpack.c.0.s8 %v1101
        %v1103 = vlaneseq
        %v1104 = vshrl.u32 %v1103, 7
        %v1105 = vsub.s32 %v1102, %v1104
        %v1106 = vrot.slane %v1099, %v1105
        %v1108 = vlaneseq
        %vm1109 = vcmp.ge.s32.totalorder %v1108, 0
        %vm1110 = vcmp.lt.s32.totalorder %v1108, 256
        %vm1111 = vmand %vm1109, %vm1110
        %1112 = vst.msk [vmem:[%s274] sm:$0x3] %vm1111, %v1106
        %s1113 = sand.u32 %s183, 1
        %s1114 = scalar_lea.sflag [#allocation4], %s1113
        %s1115 = sand.u32 %s183, 1
        %s1116 = smul.addr %s1115, 2
        %s1117 = scalar_lea.vmem [#allocation3], %s1116
        // Predicated region
        $region49: #{tpu_custom_call.1} parent=47 // pred_check
          %p1118 = pneg %p193
        $region50: #{tpu_custom_call.1} parent=47 // pred_check_branch
          %1120 = sbr.rel (%p1118) target = $region52
        $region51: #{tpu_custom_call.1} parent=47 // pred_region
          %s1121 = smul.u32 2, %s23
          %s1123 = ssub.s32 32, 32
          %1124 = vsyncadd %s1114, %s1123
          %s1125 = smul.addr %s1121, 16
          %s1126 = scalar_lea.hbm %s7, %s1125
          %s1128 = sshll.u32 %s1117, 4
          %s1129 = int_to_ptr.vmem [resolvable:$true] %s1128
          %1131 = dma.vmem_to_hbm [thread:$0]  %s1129, 32, %s1126, %s1114
        $region52: #{tpu_custom_call.1} parent=47 // pred_fallthru
          _
      $region48: #{tpu_custom_call.1} parent=5 // pred_fallthru
        _
      %p1132 = scmp.le.s32.totalorder 2, %s18
      // Predicated region
      $region53: #{tpu_custom_call.1} parent=5 // pred_check
        %p1133 = pneg %p1132
      $region54: #{tpu_custom_call.1} parent=5 // pred_check_branch
        %1135 = sbr.rel (%p1133) target = $region56
      $region55: #{tpu_custom_call.1} parent=5 // pred_region
        %s1136 = ssub.s32 %s18, 2
        // Predicated region
        $region57: #{tpu_custom_call.1} parent=55 // pred_check
          %p1137 = pneg %p199
        $region58: #{tpu_custom_call.1} parent=55 // pred_check_branch
          %1139 = sbr.rel (%p1137) target = $region60
        $region59: #{tpu_custom_call.1} parent=55 // pred_region
          %s1140 = sand.u32 %s184, 1
          %s1141 = scalar_lea.sflag [#allocation4], %s1140
          %s1142 = sand.u32 %s184, 1
          %s1143 = smul.addr %s1142, 2
          %s1144 = scalar_lea.vmem [#allocation3], %s1143
          %1145 = dma.done %s1141, 32
        $region60: #{tpu_custom_call.1} parent=55 // pred_fallthru
          _
      $region56: #{tpu_custom_call.1} parent=5 // pred_fallthru
        _
    $region6: #{tpu_custom_call.1} parent=1 // loop_footer
      %s22 = sadd.s32 1, %s18
    $region7: #{tpu_custom_call.1} parent=1 // loop_footer_branch
      %17 = sbr.rel target = $region3
    $region8: #{tpu_custom_call.1} parent=1 // loop_exit
      _
    %1146 = vsyncpa [#allocation4], 1
    %s1147 = scalar_lea.sflag [#allocation4], 1
    %1148 = vsyncpa %s1147, 1

</llo_original>
